<compile_context>
chip_gen: v7x
topology: tpu7x:2x2x1
jax: 0.10.0
libtpu: 0.0.40
codegen_flags: <defaults>
</compile_context>

<pallas_src>
import functools

import jax
import jax.numpy as jnp
from jax.experimental import pallas as pl
from jax.experimental.pallas import tpu as pltpu


# ---------------------------------------------------------------------------
# Single-pass kernel: read the tile once, pool (sum + max), tiny MLP, rescale.
# ---------------------------------------------------------------------------
def _cam_single_pass_kernel(x_ref, w1t_ref, w2t_ref, o_ref, *, inv_hw):
    # --- Global pooling over the spatial (lane) axis, f32 accumulation. ---
    # `x` is only live through the two reductions; the rescale re-indexes the
    # ref so the load->mul->store of the output can fuse.
    x = x_ref[...]                                      # (bt, C, HW)
    sum_p = jnp.sum(x, axis=-1, dtype=jnp.float32)      # (bt, C)
    max_p = jnp.max(x, axis=-1).astype(jnp.float32)     # (bt, C)
    avg_p = sum_p * inv_hw

    # --- Shared MLP (tiny). Two separate matmul pairs: avoids a sublane
    #     concat relayout when 2*bt is not a multiple of 8. ---
    w1t = w1t_ref[...]                                  # (C, hidden) == W1^T
    w2t = w2t_ref[...]                                  # (hidden, C) == W2^T

    def mlp(p):
        h = jnp.maximum(jnp.dot(p, w1t, preferred_element_type=jnp.float32), 0.0)
        return jnp.dot(h, w2t, preferred_element_type=jnp.float32)

    v = jax.nn.sigmoid(mlp(avg_p) + mlp(max_p))         # (bt, C) f32

    # --- Channel-wise rescale in the native dtype. ---
    o_ref[...] = (x_ref[...] * v.astype(o_ref.dtype)[:, :, None]).astype(o_ref.dtype)


# ---------------------------------------------------------------------------
# Two-phase fallback for feature maps too large for a single-batch VMEM tile.
# Phase 1: accumulate per-(b, C) sum / max over HW chunks (HW axis arbitrary).
# ---------------------------------------------------------------------------
def _pool_kernel(x_ref, sum_ref, max_ref, *, hw_true, hw_tile):
    h = pl.program_id(1)

    @pl.when(h == 0)
    def _():
        sum_ref[...] = jnp.zeros_like(sum_ref)
        max_ref[...] = jnp.full_like(max_ref, -jnp.inf)

    x = x_ref[...]                                      # (1, C, hw_tile)
    if hw_true % hw_tile:
        # Only the last HW chunk has an invalid tail; mask it (the padded
        # lanes of an edge block hold unspecified data).
        lane = jax.lax.broadcasted_iota(jnp.int32, x.shape, dimension=2)
        remaining = hw_true - h * hw_tile
        valid = lane < remaining
        # NOTE: assumes floating-point feature maps (jnp.finfo), as in CBAM.
        x_sum = jnp.where(valid, x, jnp.zeros((), x.dtype))
        x_max = jnp.where(valid, x, jnp.asarray(jnp.finfo(x.dtype).min, x.dtype))
    else:
        x_sum = x
        x_max = x

    sum_ref[...] += jnp.sum(x_sum, axis=-1, keepdims=True, dtype=jnp.float32)
    max_ref[...] = jnp.maximum(
        max_ref[...], jnp.max(x_max, axis=-1, keepdims=True).astype(jnp.float32))


# Phase 2: channel-wise rescale per HW chunk.
def _scale_kernel(x_ref, v_ref, o_ref):
    o_ref[...] = (x_ref[...] * v_ref[...]).astype(o_ref.dtype)


# ---------------------------------------------------------------------------
# Wrapper
# ---------------------------------------------------------------------------
def cam_block_fc(x, w1, w2, *, _force_two_phase=False, _force_hw_tile=None):
    """x: (B, C, H, W); w1: (hidden, C); w2: (C, hidden) (PyTorch Linear layout)."""
    B, C, H, W = x.shape
    HW = H * W
    hidden = w1.shape[0]

    x3 = x.reshape(B, C, HW)
    w1t = jnp.asarray(w1, dtype=jnp.float32).T          # (C, hidden)
    w2t = jnp.asarray(w2, dtype=jnp.float32).T          # (hidden, C)
    itemsize = jnp.dtype(x.dtype).itemsize

    # --- Generation-aware VMEM budget (64 MiB on v7x, 128 MiB on v5e/v6e). ---
    try:
        vmem_cap = int(pltpu.get_tpu_info().vmem_capacity_bytes)
    except Exception:  # conservative default if the query is unavailable
        vmem_cap = 64 << 20
    vmem_limit = int(min(vmem_cap * 0.9, vmem_cap - (8 << 20)))
    w_bytes = 2 * (w1t.size + w2t.size) * 4              # double-buffered weights
    # Budget for the 4 double-buffered input+output tile slabs, with headroom
    # for weights, in-kernel temporaries and Mosaic internal scratch.
    tile_budget = max(8 << 20, int(vmem_limit * 0.72) - w_bytes)

    bytes_per_batch = C * HW * itemsize                  # one (1, C, HW) slab
    cost = pl.CostEstimate(
        flops=int(8 * B * C * hidden + 2 * B * C * HW),
        transcendentals=int(B * C),
        bytes_accessed=int(2 * B * C * HW * itemsize + 2 * w_bytes),
    )

    single_pass_ok = (4 * bytes_per_batch <= tile_budget) and not _force_two_phase

    if single_pass_ok:
        # bt from the VMEM budget; cap at ceil(B/2) so the parallel batch axis
        # has at least two blocks (keeps both v7x TensorCores busy).
        bt = min(B, max(1, tile_budget // (4 * bytes_per_batch)))
        if B >= 2:
            bt = min(bt, pl.cdiv(B, 2))
        grid_b = pl.cdiv(B, bt)                          # masked last block if B % bt

        out3 = pl.pallas_call(
            functools.partial(_cam_single_pass_kernel, inv_hw=1.0 / HW),
            out_shape=jax.ShapeDtypeStruct((B, C, HW), x.dtype),
            grid_spec=pltpu.PrefetchScalarGridSpec(
                num_scalar_prefetch=0,
                grid=(grid_b,),
                in_specs=[
                    # Last two block dims equal the full (C, HW) dims, so no
                    # padding is needed even when HW % 128 != 0.
                    pl.BlockSpec((bt, C, HW), lambda b: (b, 0, 0)),
                    pl.BlockSpec(w1t.shape, lambda b: (0, 0)),
                    pl.BlockSpec(w2t.shape, lambda b: (0, 0)),
                ],
                out_specs=pl.BlockSpec((bt, C, HW), lambda b: (b, 0, 0)),
            ),
            compiler_params=pltpu.CompilerParams(
                dimension_semantics=("parallel",),
                vmem_limit_bytes=vmem_limit,
            ),
            cost_estimate=cost,
        )(x3, w1t, w2t)
        return out3.reshape(B, C, H, W)

    # ------------------- Two-phase fallback (large HW * C) -------------------
    hw_tile = max(128, (tile_budget // (4 * C * itemsize)) // 128 * 128)
    hw_tile = int(min(hw_tile, pl.cdiv(HW, 128) * 128))
    if _force_hw_tile is not None:
        hw_tile = int(_force_hw_tile)
    n_hw = pl.cdiv(HW, hw_tile)

    sum3, max3 = pl.pallas_call(
        functools.partial(_pool_kernel, hw_true=HW, hw_tile=hw_tile),
        out_shape=(jax.ShapeDtypeStruct((B, C, 1), jnp.float32),
                   jax.ShapeDtypeStruct((B, C, 1), jnp.float32)),
        grid_spec=pltpu.PrefetchScalarGridSpec(
            num_scalar_prefetch=0,
            grid=(B, n_hw),
            in_specs=[pl.BlockSpec((1, C, hw_tile), lambda b, h: (b, 0, h))],
            out_specs=[pl.BlockSpec((1, C, 1), lambda b, h: (b, 0, 0)),
                       pl.BlockSpec((1, C, 1), lambda b, h: (b, 0, 0))],
        ),
        compiler_params=pltpu.CompilerParams(
            dimension_semantics=("parallel", "arbitrary"),
            vmem_limit_bytes=vmem_limit,
        ),
    )(x3)

    # Tiny (B, C) shared MLP: negligible work, done in plain XLA.
    avg = sum3.reshape(B, C) * (1.0 / HW)
    mx = max3.reshape(B, C)
    y = (jnp.maximum(avg @ w1t, 0.0) @ w2t) + (jnp.maximum(mx @ w1t, 0.0) @ w2t)
    v3 = jax.nn.sigmoid(y).astype(x.dtype).reshape(B, C, 1)

    out3 = pl.pallas_call(
        _scale_kernel,
        out_shape=jax.ShapeDtypeStruct((B, C, HW), x.dtype),
        grid_spec=pltpu.PrefetchScalarGridSpec(
            num_scalar_prefetch=0,
            grid=(B, n_hw),
            in_specs=[pl.BlockSpec((1, C, hw_tile), lambda b, h: (b, 0, h)),
                      pl.BlockSpec((1, C, 1), lambda b, h: (b, 0, 0))],
            out_specs=pl.BlockSpec((1, C, hw_tile), lambda b, h: (b, 0, h)),
        ),
        compiler_params=pltpu.CompilerParams(
            dimension_semantics=("parallel", "parallel"),
            vmem_limit_bytes=vmem_limit,
        ),
        cost_estimate=cost,
    )(x3, v3)
    return out3.reshape(B, C, H, W)


def cam_block_fc_ref(x, w1, w2):
    """Pure-JAX reference mirroring the PyTorch forward."""
    xf = x.astype(jnp.float32)
    avg = jnp.mean(xf, axis=(2, 3))
    mx = jnp.max(xf, axis=(2, 3))

    def mlp(p):
        return jnp.maximum(p @ w1.T, 0.0) @ w2.T

    v = jax.nn.sigmoid(mlp(avg) + mlp(mx))
    return xf * v[:, :, None, None]


if __name__ == "__main__":
    key = jax.random.PRNGKey(0)

    def make_case(k, B, C, H, W, ratio, dtype=jnp.float32):
        kx, k1, k2 = jax.random.split(k, 3)
        hidden = max(1, C // ratio)
        x = jax.random.normal(kx, (B, C, H, W), dtype=jnp.float32).astype(dtype)
        # nn.Linear weights: (out, in), init.normal_(std=0.001), no bias.
        w1 = 0.001 * jax.random.normal(k1, (hidden, C), dtype=jnp.float32)
        w2 = 0.001 * jax.random.normal(k2, (C, hidden), dtype=jnp.float32)
        return x, w1, w2

    # --- f32 cases: aligned HW, non-128 HW (no padding path), odd batch. ---
    cases = [
        (2, 64, 16, 16, 16),   # HW = 256
        (2, 32, 8, 8, 16),     # HW = 64  -> full-dim block, no padding
        (3, 32, 8, 8, 16),     # odd B    -> cdiv grid with masked tail block
    ]
    for (B, C, H, W, ratio) in cases:
        key, sub = jax.random.split(key)
        x, w1, w2 = make_case(sub, B, C, H, W, ratio)
        out = jax.block_until_ready(cam_block_fc(x, w1, w2))
        ref = cam_block_fc_ref(x, w1, w2)
        assert out.shape == (B, C, H, W)
        assert jnp.allclose(out, ref, atol=1e-5, rtol=1e-5), \
            f"f32 mismatch for shape {(B, C, H, W)}"

    # --- bf16 I/O path (memory-bound kernel => ~2x fewer bytes moved). ---
    key, sub = jax.random.split(key)
    x_bf, w1, w2 = make_case(sub, 2, 64, 16, 16, 16, dtype=jnp.bfloat16)
    out_bf = jax.block_until_ready(cam_block_fc(x_bf, w1, w2))
    ref_bf = cam_block_fc_ref(x_bf, w1, w2)
    assert out_bf.dtype == jnp.bfloat16 and out_bf.shape == (2, 64, 16, 16)
    assert jnp.allclose(out_bf.astype(jnp.float32), ref_bf, atol=3e-2, rtol=3e-2), \
        "bf16 mismatch"

    # --- Two-phase fallback path (forced, with a non-dividing HW tail). ---
    key, sub = jax.random.split(key)
    x, w1, w2 = make_case(sub, 2, 32, 24, 24, 16)       # HW = 576
    out2 = jax.block_until_ready(
        cam_block_fc(x, w1, w2, _force_two_phase=True, _force_hw_tile=128))
    ref2 = cam_block_fc_ref(x, w1, w2)
    assert jnp.allclose(out2, ref2, atol=1e-5, rtol=1e-5), "two-phase mismatch"

    print("KERNEL_OK")
</pallas_src>

<mosaic_0001>
module attributes {stable_mosaic.version = 11 : i64} {
  func.func @_cam_single_pass_kernel(%arg0: i32, %arg1: memref<1x64x256xf32, #tpu.memory_space<vmem>>, %arg2: memref<64x4xf32, #tpu.memory_space<vmem>>, %arg3: memref<4x64xf32, #tpu.memory_space<vmem>>, %arg4: memref<1x64x256xf32, #tpu.memory_space<vmem>>) attributes {dimension_semantics = [#tpu.dimension_semantics<parallel>], iteration_bounds = array<i64: 2>, scalar_prefetch = 0 : i64, scratch_operands = 0 : i64, tpu.core_type = #tpu.core_type<tc>, window_params = [{transform_indices = @transform_0, window_bounds = array<i64: 1, 64, 256>}, {pipeline_mode = #tpu.pipeline_mode<synchronous>, transform_indices = @transform_1, window_bounds = array<i64: 64, 4>}, {pipeline_mode = #tpu.pipeline_mode<synchronous>, transform_indices = @transform_2, window_bounds = array<i64: 4, 64>}, {transform_indices = @transform_3, window_bounds = array<i64: 1, 64, 256>}]} {
    %c0 = arith.constant 0 : index
    %c0_0 = arith.constant 0 : index
    %c0_1 = arith.constant 0 : index
    %0 = vector.load %arg1[%c0, %c0_0, %c0_1] : memref<1x64x256xf32, #tpu.memory_space<vmem>>, vector<1x64x256xf32>
    %cst = arith.constant dense<0.000000e+00> : vector<1x64xf32>
    %1 = vector.multi_reduction <add>, %0, %cst [2] : vector<1x64x256xf32> to vector<1x64xf32>
    %cst_2 = arith.constant dense<0xFF800000> : vector<1x64xf32>
    %2 = vector.multi_reduction <maximumf>, %0, %cst_2 [2] : vector<1x64x256xf32> to vector<1x64xf32>
    %cst_3 = arith.constant 3.906250e-03 : f32
    %3 = vector.broadcast %cst_3 : f32 to vector<1x64xf32>
    %4 = arith.mulf %1, %3 : vector<1x64xf32>
    %c0_4 = arith.constant 0 : index
    %c0_5 = arith.constant 0 : index
    %5 = vector.load %arg2[%c0_4, %c0_5] : memref<64x4xf32, #tpu.memory_space<vmem>>, vector<64x4xf32>
    %c0_6 = arith.constant 0 : index
    %c0_7 = arith.constant 0 : index
    %6 = vector.load %arg3[%c0_6, %c0_7] : memref<4x64xf32, #tpu.memory_space<vmem>>, vector<4x64xf32>
    %cst_8 = arith.constant dense<0.000000e+00> : vector<1x4xf32>
    %7 = tpu.matmul %4, %5, %cst_8 {dimension_numbers = #tpu.dot_dimension_numbers<[1], [0], [0], [1], [0, 0, 1, 1], [], []>} : vector<1x64xf32>, vector<64x4xf32>, vector<1x4xf32> -> vector<1x4xf32>
    %cst_9 = arith.constant 0.000000e+00 : f32
    %8 = vector.broadcast %cst_9 : f32 to vector<1x4xf32>
    %9 = arith.maximumf %7, %8 : vector<1x4xf32>
    %cst_10 = arith.constant dense<0.000000e+00> : vector<1x64xf32>
    %10 = tpu.matmul %9, %6, %cst_10 {dimension_numbers = #tpu.dot_dimension_numbers<[1], [0], [0], [1], [0, 0, 1, 1], [], []>} : vector<1x4xf32>, vector<4x64xf32>, vector<1x64xf32> -> vector<1x64xf32>
    %cst_11 = arith.constant dense<0.000000e+00> : vector<1x4xf32>
    %11 = tpu.matmul %2, %5, %cst_11 {dimension_numbers = #tpu.dot_dimension_numbers<[1], [0], [0], [1], [0, 0, 1, 1], [], []>} : vector<1x64xf32>, vector<64x4xf32>, vector<1x4xf32> -> vector<1x4xf32>
    %cst_12 = arith.constant 0.000000e+00 : f32
    %12 = vector.broadcast %cst_12 : f32 to vector<1x4xf32>
    %13 = arith.maximumf %11, %12 : vector<1x4xf32>
    %cst_13 = arith.constant dense<0.000000e+00> : vector<1x64xf32>
    %14 = tpu.matmul %13, %6, %cst_13 {dimension_numbers = #tpu.dot_dimension_numbers<[1], [0], [0], [1], [0, 0, 1, 1], [], []>} : vector<1x4xf32>, vector<4x64xf32>, vector<1x64xf32> -> vector<1x64xf32>
    %15 = arith.addf %10, %14 : vector<1x64xf32>
    %16 = arith.negf %15 : vector<1x64xf32>
    %17 = math.exp %16 : vector<1x64xf32>
    %cst_14 = arith.constant 1.000000e+00 : f32
    %18 = vector.broadcast %cst_14 : f32 to vector<1x64xf32>
    %19 = arith.addf %18, %17 : vector<1x64xf32>
    %20 = arith.divf %18, %19 : vector<1x64xf32>
    %c0_15 = arith.constant 0 : index
    %c0_16 = arith.constant 0 : index
    %c0_17 = arith.constant 0 : index
    %21 = vector.load %arg1[%c0_15, %c0_16, %c0_17] : memref<1x64x256xf32, #tpu.memory_space<vmem>>, vector<1x64x256xf32>
    %22 = vector.shape_cast %20 : vector<1x64xf32> to vector<1x64x1xf32>
    %23 = vector.broadcast %22 : vector<1x64x1xf32> to vector<1x64x256xf32>
    %24 = arith.mulf %21, %23 : vector<1x64x256xf32>
    %c0_18 = arith.constant 0 : index
    %c0_19 = arith.constant 0 : index
    %c0_20 = arith.constant 0 : index
    %25 = vector.load %arg4[%c0_18, %c0_19, %c0_20] : memref<1x64x256xf32, #tpu.memory_space<vmem>>, vector<1x64x256xf32>
    tpu.vector_store %arg4[%c0_18, %c0_19, %c0_20], %24 {strides = array<i32>} : memref<1x64x256xf32, #tpu.memory_space<vmem>>, vector<1x64x256xf32>,
    return
  }
  func.func @transform_0(%arg0: i32) -> (i32, i32, i32) {
    %c0_i32 = arith.constant 0 : i32
    %c0_i32_0 = arith.constant 0 : i32
    %c0_i32_1 = arith.constant 0 : i32
    return %arg0, %c0_i32, %c0_i32_0 : i32, i32, i32
  }
  func.func @transform_1(%arg0: i32) -> (i32, i32) {
    %c0_i32 = arith.constant 0 : i32
    %c0_i32_0 = arith.constant 0 : i32
    %c0_i32_1 = arith.constant 0 : i32
    return %c0_i32, %c0_i32_0 : i32, i32
  }
  func.func @transform_2(%arg0: i32) -> (i32, i32) {
    %c0_i32 = arith.constant 0 : i32
    %c0_i32_0 = arith.constant 0 : i32
    %c0_i32_1 = arith.constant 0 : i32
    return %c0_i32, %c0_i32_0 : i32, i32
  }
  func.func @transform_3(%arg0: i32) -> (i32, i32, i32) {
    %c0_i32 = arith.constant 0 : i32
    %c0_i32_0 = arith.constant 0 : i32
    %c0_i32_1 = arith.constant 0 : i32
    return %arg0, %c0_i32, %c0_i32_0 : i32, i32, i32
  }
}

</mosaic_0001>

<llo_original>
// kernel: tpu_custom_call.1
$region0: #{tpu_custom_call.1}
  #allocation0 [shape = 'u32[]', space=smem, size = 0x4, offset = 0x4, fixed_abs, tag = 'smem constant byte address 0x4 - core index']
  #allocation1 [shape = 'u32[144,128]{1,0:T(1,128)}', space=vmem, size = 0x12000, scoped, tag = 'internal scratch']
  %s0 = inlined_call_operand.hbm [shape: f32[2,64,256], index: 0, kind: input, shape index: {}]
  %s1 = inlined_call_operand.vmem [shape: f32[64,4], index: 1, kind: input, shape index: {}]
  %s2 = inlined_call_operand.vmem [shape: f32[4,64], index: 2, kind: input, shape index: {}]
  %s3 = inlined_call_operand.hbm [shape: f32[2,64,256], index: 3, kind: output, shape index: {}]
  %s4 = sld [smem:[#allocation0]]
  $region49: #{tpu_custom_call.1} parent=0
    _
  %s6 = ssub.s32 1, %s4
  %s7 = scalar_select 0, %s6, %s4
  $region1: #{tpu_custom_call.1} parent=0
    #allocation2 [shape = 'u8[131072]{0}', space=vmem, size = 0x20000, scoped, tag = 'input window, operand 0']
    #allocation3 [shape = 's32[2]{0}', space=sflag, size = 0x8, scoped, tag = 'scoped memory for tpu_custom_call.1']
    #allocation4 [shape = 's32[2]{0}', space=sflag, size = 0x8, scoped, tag = 'scoped memory for tpu_custom_call.1']
    #allocation5 [shape = 'u8[131072]{0}', space=vmem, size = 0x20000, scoped, tag = 'output window, operand 0']
    %8 = vsyncpa [#allocation3], 0
    %s9 = scalar_lea.sflag [#allocation3], 1
    %10 = vsyncpa %s9, 0
    %11 = vsyncpa [#allocation4], 0
    %s12 = scalar_lea.sflag [#allocation4], 1
    %13 = vsyncpa %s12, 0
    loop: start=0, step=1, limit=4
    $region2: #{tpu_custom_call.1} parent=1 // loop_pre_header
      _
    $region3: #{tpu_custom_call.1} parent=1 // loop_header
      %s15 = sphi 0, %s19
      %p16 = scmp.ge.s32.totalorder %s15, 4
      %s25 = sphi 0, %s27
      %s28 = sphi 0, %s25
      %s29 = sphi 0, %s28
      %s45 = sphi 0, %s29
      %s49 = sphi 0, %s49
      %s51 = sphi 0, %s49
      %s52 = sphi 0, %s51
      %s66 = sphi 0, %s52
      %s70 = sphi 0, %s70
      %s72 = sphi 0, %s70
      %s73 = sphi 0, %s72
      %s87 = sphi 0, %s73
      %s93 = sphi 0, %s95
      %s96 = sphi 0, %s93
      %s97 = sphi 0, %s96
      %s113 = sphi 0, %s97
    $region4: #{tpu_custom_call.1} parent=1 // loop_header_branch
      %18 = sbr.rel (%p16) target = $region8
    $region5: #{tpu_custom_call.1} parent=1 // loop_body
      %s20 = ssub.s32 %s15, 1
      %s21 = ssub.s32 %s15, 2
      %s22 = sadd.s32 %s15, 1
      %s23 = ssub.s32 %s15, %s22
      %p24 = scmp.eq.s32.totalorder %s23, 0
      %s26 = sadd.s32 %s25, 1
      %s27 = scalar_select %p24, %s25, %s26
      %p30 = pneg %p24
      %p31 = scmp.eq.s32.totalorder %s15, 1
      %p32 = por %p30, %p31
      %p33 = scmp.ne.s32.totalorder %s25, %s28
      %p34 = scmp.eq.s32.totalorder %s15, 0
      %p35 = por %p33, %p34
      %p36 = scmp.ne.s32.totalorder %s25, %s28
      %p37 = scmp.eq.s32.totalorder %s20, 1
      %p38 = por %p36, %p37
      %p39 = scmp.ne.s32.totalorder %s28, %s29
      %p40 = scmp.eq.s32.totalorder %s20, 0
      %p41 = por %p39, %p40
      %p42 = scmp.ne.s32.totalorder %s28, %s29
      %p43 = scmp.eq.s32.totalorder %s21, 1
      %p44 = por %p42, %p43
      %p46 = scmp.ne.s32.totalorder %s29, %s45
      %p47 = scmp.eq.s32.totalorder %s21, 0
      %p48 = por %p46, %p47
      %s50 = sadd.s32 %s49, 1
      %p53 = scmp.eq.s32.totalorder %s15, 1
      %p54 = scmp.ne.s32.totalorder %s49, %s51
      %p55 = scmp.eq.s32.totalorder %s15, 0
      %p56 = por %p54, %p55
      %p57 = scmp.ne.s32.totalorder %s49, %s51
      %p58 = scmp.eq.s32.totalorder %s20, 1
      %p59 = por %p57, %p58
      %p60 = scmp.ne.s32.totalorder %s51, %s52
      %p61 = scmp.eq.s32.totalorder %s20, 0
      %p62 = por %p60, %p61
      %p63 = scmp.ne.s32.totalorder %s51, %s52
      %p64 = scmp.eq.s32.totalorder %s21, 1
      %p65 = por %p63, %p64
      %p67 = scmp.ne.s32.totalorder %s52, %s66
      %p68 = scmp.eq.s32.totalorder %s21, 0
      %p69 = por %p67, %p68
      %s71 = sadd.s32 %s70, 1
      %p74 = scmp.eq.s32.totalorder %s15, 1
      %p75 = scmp.ne.s32.totalorder %s70, %s72
      %p76 = scmp.eq.s32.totalorder %s15, 0
      %p77 = por %p75, %p76
      %p78 = scmp.ne.s32.totalorder %s70, %s72
      %p79 = scmp.eq.s32.totalorder %s20, 1
      %p80 = por %p78, %p79
      %p81 = scmp.ne.s32.totalorder %s72, %s73
      %p82 = scmp.eq.s32.totalorder %s20, 0
      %p83 = por %p81, %p82
      %p84 = scmp.ne.s32.totalorder %s72, %s73
      %p85 = scmp.eq.s32.totalorder %s21, 1
      %p86 = por %p84, %p85
      %p88 = scmp.ne.s32.totalorder %s73, %s87
      %p89 = scmp.eq.s32.totalorder %s21, 0
      %p90 = por %p88, %p89
      %s91 = ssub.s32 %s15, %s22
      %p92 = scmp.eq.s32.totalorder %s91, 0
      %s94 = sadd.s32 %s93, 1
      %s95 = scalar_select %p92, %s93, %s94
      %p98 = pneg %p92
      %p99 = scmp.eq.s32.totalorder %s15, 1
      %p100 = por %p98, %p99
      %p101 = scmp.ne.s32.totalorder %s93, %s96
      %p102 = scmp.eq.s32.totalorder %s15, 0
      %p103 = por %p101, %p102
      %p104 = scmp.ne.s32.totalorder %s93, %s96
      %p105 = scmp.eq.s32.totalorder %s20, 1
      %p106 = por %p104, %p105
      %p107 = scmp.ne.s32.totalorder %s96, %s97
      %p108 = scmp.eq.s32.totalorder %s20, 0
      %p109 = por %p107, %p108
      %p110 = scmp.ne.s32.totalorder %s96, %s97
      %p111 = scmp.eq.s32.totalorder %s21, 1
      %p112 = por %p110, %p111
      %p114 = scmp.ne.s32.totalorder %s97, %s113
      %p115 = scmp.eq.s32.totalorder %s21, 0
      %p116 = por %p114, %p115
      %p117 = scmp.le.s32.totalorder 1, %s15
      %p118 = scmp.lt.s32.totalorder %s15, 3
      %p119 = pnand %p117, %p118
      %p120 = pneg %p119
      // Predicated region
      $region9: #{tpu_custom_call.1} parent=5 // pred_check
        _
      $region10: #{tpu_custom_call.1} parent=5 // pred_check_branch
        %122 = sbr.rel (%p119) target = $region12
      $region11: #{tpu_custom_call.1} parent=5 // pred_region
        %s123 = ssub.s32 %s15, 1
        // Predicated region
        $region13: #{tpu_custom_call.1} parent=11 // pred_check
          %p124 = pneg %p62
        $region14: #{tpu_custom_call.1} parent=11 // pred_check_branch
          %126 = sbr.rel (%p124) target = $region16
        $region15: #{tpu_custom_call.1} parent=11 // pred_region
          _
        $region16: #{tpu_custom_call.1} parent=11 // pred_fallthru
          _
        // Predicated region
        $region17: #{tpu_custom_call.1} parent=11 // pred_check
          %p127 = pneg %p83
        $region18: #{tpu_custom_call.1} parent=11 // pred_check_branch
          %129 = sbr.rel (%p127) target = $region20
        $region19: #{tpu_custom_call.1} parent=11 // pred_region
          _
        $region20: #{tpu_custom_call.1} parent=11 // pred_fallthru
          _
      $region12: #{tpu_custom_call.1} parent=5 // pred_fallthru
        _
      %p130 = scmp.lt.s32.totalorder %s15, 2
      // Predicated region
      $region21: #{tpu_custom_call.1} parent=5 // pred_check
        %p131 = pneg %p130
      $region22: #{tpu_custom_call.1} parent=5 // pred_check_branch
        %133 = sbr.rel (%p131) target = $region24
      $region23: #{tpu_custom_call.1} parent=5 // pred_region
        // Predicated region
        $region25: #{tpu_custom_call.1} parent=23 // pred_check
          %p134 = pneg %p35
        $region26: #{tpu_custom_call.1} parent=23 // pred_check_branch
          %136 = sbr.rel (%p134) target = $region28
        $region27: #{tpu_custom_call.1} parent=23 // pred_region
          %s137 = sand.u32 %s25, 1
          %s138 = scalar_lea.sflag [#allocation3], %s137
          %s139 = sand.u32 %s25, 1
          %s140 = smul.addr %s139, 128
          %s141 = scalar_lea.vmem [#allocation2], %s140
          %s143 = ssub.s32 2048, 2048
          %144 = vsyncadd %s138, %s143
          %s145 = smul.addr %s15, 16
          %s146 = smul.addr %s145, 128
          %s147 = scalar_lea.hbm %s0, %s146
          %s148 = sshll.u32 %s141, 4
          %s149 = int_to_ptr.vmem [resolvable:$true] %s148
          %154 = dma.hbm_to_vmem [thread:$0]  %s147, 2048, %s149, %s138, 256, 256, 16
        $region28: #{tpu_custom_call.1} parent=23 // pred_fallthru
          _
      $region24: #{tpu_custom_call.1} parent=5 // pred_fallthru
        _
      %p155 = scmp.le.s32.totalorder 1, %s15
      %p156 = scmp.lt.s32.totalorder %s15, 3
      %p157 = pnand %p155, %p156
      %p158 = pneg %p157
      // Predicated region
      $region29: #{tpu_custom_call.1} parent=5 // pred_check
        _
      $region30: #{tpu_custom_call.1} parent=5 // pred_check_branch
        %160 = sbr.rel (%p157) target = $region32
      $region31: #{tpu_custom_call.1} parent=5 // pred_region
        %s161 = ssub.s32 %s15, 1
        %s162 = sand.u32 %s28, 1
        %s163 = scalar_lea.sflag [#allocation3], %s162
        %s164 = sand.u32 %s28, 1
        %s165 = smul.addr %s164, 128
        %s166 = scalar_lea.vmem [#allocation2], %s165
        // Predicated region
        $region33: #{tpu_custom_call.1} parent=31 // pred_check
          %p167 = pneg %p41
        $region34: #{tpu_custom_call.1} parent=31 // pred_check_branch
          %169 = sbr.rel (%p167) target = $region36
        $region35: #{tpu_custom_call.1} parent=31 // pred_region
          %170 = dma.done %s163, 2048
        $region36: #{tpu_custom_call.1} parent=31 // pred_fallthru
          _
        %s171 = sand.u32 %s28, 1
        %s172 = scalar_lea.sflag [#allocation3], %s171
        %s173 = sand.u32 %s28, 1
        %s174 = smul.addr %s173, 128
        %s175 = scalar_lea.vmem [#allocation2], %s174
        %p176 = pneg %p41
        %p177 = pneg %p38
        %p178 = pneg %p62
        %p179 = pneg %p59
        %p180 = pneg %p83
        %p181 = pneg %p80
        %p182 = pneg %p109
        %p183 = pneg %p106
        %s184 = sand.u32 %s96, 1
        %s185 = scalar_lea.sflag [#allocation4], %s184
        %s186 = sand.u32 %s96, 1
        %s187 = smul.addr %s186, 128
        %s188 = scalar_lea.vmem [#allocation5], %s187
        %v189 = vld [vmem:[%s166] sm:$0xff]
        %v190 = vld [vmem:[%s166 + $0x8] sm:$0xff]
        %v191 = vld [vmem:[%s166 + $0x10] sm:$0xff]
        %v192 = vld [vmem:[%s166 + $0x18] sm:$0xff]
        %v193 = vld [vmem:[%s166 + $0x20] sm:$0xff]
        %v194 = vld [vmem:[%s166 + $0x28] sm:$0xff]
        %v195 = vld [vmem:[%s166 + $0x30] sm:$0xff]
        %v196 = vld [vmem:[%s166 + $0x38] sm:$0xff]
        %v197 = vld [vmem:[%s166 + $0x40] sm:$0xff]
        %v198 = vld [vmem:[%s166 + $0x48] sm:$0xff]
        %v199 = vld [vmem:[%s166 + $0x50] sm:$0xff]
        %v200 = vld [vmem:[%s166 + $0x58] sm:$0xff]
        %v201 = vld [vmem:[%s166 + $0x60] sm:$0xff]
        %v202 = vld [vmem:[%s166 + $0x68] sm:$0xff]
        %v203 = vld [vmem:[%s166 + $0x70] sm:$0xff]
        %v204 = vld [vmem:[%s166 + $0x78] sm:$0xff]
        %v205 = vadd.f32 %v189, %v190
        %206 = vadd.xlane.f32.xlu0 %v205
        %v207 = vpop.xlane.xlu0 %206
        %v208 = vadd.f32 %v191, %v192
        %209 = vadd.xlane.f32.xlu0 %v208
        %v210 = vpop.xlane.xlu0 %209
        %v211 = vadd.f32 %v193, %v194
        %212 = vadd.xlane.f32.xlu0 %v211
        %v213 = vpop.xlane.xlu0 %212
        %v214 = vadd.f32 %v195, %v196
        %215 = vadd.xlane.f32.xlu0 %v214
        %v216 = vpop.xlane.xlu0 %215
        %v217 = vadd.f32 %v197, %v198
        %218 = vadd.xlane.f32.xlu0 %v217
        %v219 = vpop.xlane.xlu0 %218
        %v220 = vadd.f32 %v199, %v200
        %221 = vadd.xlane.f32.xlu0 %v220
        %v222 = vpop.xlane.xlu0 %221
        %v223 = vadd.f32 %v201, %v202
        %224 = vadd.xlane.f32.xlu0 %v223
        %v225 = vpop.xlane.xlu0 %224
        %v226 = vadd.f32 %v203, %v204
        %227 = vadd.xlane.f32.xlu0 %v226
        %v228 = vpop.xlane.xlu0 %227
        %v229 = vmax.f32 %v189, %v190
        %230 = vmax.xlane.f32.xlu0 %v229
        %v231 = vpop.xlane.xlu0 %230
        %v232 = vmax.f32 %v191, %v192
        %233 = vmax.xlane.f32.xlu0 %v232
        %v234 = vpop.xlane.xlu0 %233
        %v235 = vmax.f32 %v193, %v194
        %236 = vmax.xlane.f32.xlu0 %v235
        %v237 = vpop.xlane.xlu0 %236
        %v238 = vmax.f32 %v195, %v196
        %239 = vmax.xlane.f32.xlu0 %v238
        %v240 = vpop.xlane.xlu0 %239
        %v241 = vmax.f32 %v197, %v198
        %242 = vmax.xlane.f32.xlu0 %v241
        %v243 = vpop.xlane.xlu0 %242
        %v244 = vmax.f32 %v199, %v200
        %245 = vmax.xlane.f32.xlu0 %v244
        %v246 = vpop.xlane.xlu0 %245
        %v247 = vmax.f32 %v201, %v202
        %248 = vmax.xlane.f32.xlu0 %v247
        %v249 = vpop.xlane.xlu0 %248
        %v250 = vmax.f32 %v203, %v204
        %251 = vmax.xlane.f32.xlu0 %v250
        %v252 = vpop.xlane.xlu0 %251
        %v253 = vmul.f32 %v207, 0.00390625
        %v254 = vmul.f32 %v210, 0.00390625
        %v255 = vmul.f32 %v213, 0.00390625
        %v256 = vmul.f32 %v216, 0.00390625
        %v257 = vmul.f32 %v219, 0.00390625
        %v258 = vmul.f32 %v222, 0.00390625
        %v259 = vmul.f32 %v225, 0.00390625
        %v260 = vmul.f32 %v228, 0.00390625
        %v261 = vld [vmem:[%s1] sm:$0xff]
        %v262 = vld [vmem:[%s1 + $0x8] sm:$0xff]
        %v263 = vld [vmem:[%s1 + $0x10] sm:$0xff]
        %v264 = vld [vmem:[%s1 + $0x18] sm:$0xff]
        %v265 = vld [vmem:[%s1 + $0x20] sm:$0xff]
        %v266 = vld [vmem:[%s1 + $0x28] sm:$0xff]
        %v267 = vld [vmem:[%s1 + $0x30] sm:$0xff]
        %v268 = vld [vmem:[%s1 + $0x38] sm:$0xff]
        %v269 = vld [vmem:[%s2] sm:$0xf]
        %v278 = vlaneseq
        %v279 = vand.u32 %v278, 127
        %v280 = vlaneseq
        %v281 = vshrl.u32 %v280, 7
        %v282 = vsub.s32 %v279, %v281
        %v283 = vrot.slane %v253, %v282
        %v284 = vadd.s32 %v279, 4294967288
        %v285 = vlaneseq
        %v286 = vshrl.u32 %v285, 7
        %v287 = vsub.s32 %v284, %v286
        %v288 = vrot.slane %v254, %v287
        %vm289 = vcmask 130112
        %v290 = vsel %vm289, %v288, %v283
        %v291 = vadd.s32 %v279, 4294967280
        %v292 = vlaneseq
        %v293 = vshrl.u32 %v292, 7
        %v294 = vsub.s32 %v291, %v293
        %v295 = vrot.slane %v255, %v294
        %vm296 = vcmask 195712
        %v297 = vsel %vm296, %v295, %v290
        %v298 = vadd.s32 %v279, 4294967272
        %v299 = vlaneseq
        %v300 = vshrl.u32 %v299, 7
        %v301 = vsub.s32 %v298, %v300
        %v302 = vrot.slane %v256, %v301
        %vm303 = vcmask 261312
        %v304 = vsel %vm303, %v302, %v297
        %v305 = vadd.s32 %v279, 4294967264
        %v306 = vlaneseq
        %v307 = vshrl.u32 %v306, 7
        %v308 = vsub.s32 %v305, %v307
        %v309 = vrot.slane %v257, %v308
        %vm310 = vcmask 326912
        %v311 = vsel %vm310, %v309, %v304
        %v312 = vadd.s32 %v279, 4294967256
        %v313 = vlaneseq
        %v314 = vshrl.u32 %v313, 7
        %v315 = vsub.s32 %v312, %v314
        %v316 = vrot.slane %v258, %v315
        %vm317 = vcmask 392512
        %v318 = vsel %vm317, %v316, %v311
        %v319 = vadd.s32 %v279, 4294967248
        %v320 = vlaneseq
        %v321 = vshrl.u32 %v320, 7
        %v322 = vsub.s32 %v319, %v321
        %v323 = vrot.slane %v259, %v322
        %vm324 = vcmask 458112
        %v325 = vsel %vm324, %v323, %v318
        %v326 = vadd.s32 %v279, 4294967240
        %v327 = vlaneseq
        %v328 = vshrl.u32 %v327, 7
        %v329 = vsub.s32 %v326, %v328
        %v330 = vrot.slane %v260, %v329
        %vm331 = vcmask 523712
        %v332 = vsel %vm331, %v330, %v325
        %vm333 = vcmask 523264
        %v334 = vsel %vm333, %v332, 0
        %336 = vmatprep.subr.mxu0 0.0
        %337 = vmatpush1.msra.mxu0 %v261
        %338 = vmatprep.subr.mxu0 0.0
        %339 = vmatpush1.msra.mxu0 %v262
        %340 = vmatprep.subr.mxu0 0.0
        %341 = vmatpush1.msra.mxu0 %v263
        %342 = vmatprep.subr.mxu0 0.0
        %343 = vmatpush1.msra.mxu0 %v264
        %344 = vmatprep.subr.mxu0 0.0
        %345 = vmatpush1.msra.mxu0 %v265
        %346 = vmatprep.subr.mxu0 0.0
        %347 = vmatpush1.msra.mxu0 %v266
        %348 = vmatprep.subr.mxu0 0.0
        %349 = vmatpush1.msra.mxu0 %v267
        %350 = vmatprep.subr.mxu0 0.0
        %351 = vmatpush1.msra.mxu0 %v268
        %352 = vmatprep.subr.mxu0 0.0
        %353 = vmatpush1.msra.mxu0 0.0
        %354 = vmatprep.subr.mxu0 0.0
        %355 = vmatpush1.msra.mxu0 0.0
        %356 = vmatprep.subr.mxu0 0.0
        %357 = vmatpush1.msra.mxu0 0.0
        %358 = vmatprep.subr.mxu0 0.0
        %359 = vmatpush1.msra.mxu0 0.0
        %360 = vmatprep.subr.mxu0 0.0
        %361 = vmatpush1.msra.mxu0 0.0
        %362 = vmatprep.subr.mxu0 0.0
        %363 = vmatpush1.msra.mxu0 0.0
        %364 = vmatprep.subr.mxu0 0.0
        %365 = vmatpush1.msra.mxu0 0.0
        %366 = vmatprep.subr.mxu0 0.0
        %367 = vmatpush1.msra.mxu0 0.0
        %368 = vmatprep.subr.mxu0 0.0
        %369 = vmatpush1.msra.mxu0 0.0
        %370 = vmatprep.subr.mxu0 0.0
        %371 = vmatpush1.msra.mxu0 0.0
        %372 = vmatprep.subr.mxu0 0.0
        %373 = vmatpush1.msra.mxu0 0.0
        %374 = vmatprep.subr.mxu0 0.0
        %375 = vmatpush1.msra.mxu0 0.0
        %376 = vmatprep.subr.mxu0 0.0
        %377 = vmatpush1.msra.mxu0 0.0
        %378 = vmatprep.subr.mxu0 0.0
        %379 = vmatpush1.msra.mxu0 0.0
        %380 = vmatprep.subr.mxu0 0.0
        %381 = vmatpush1.msra.mxu0 0.0
        %382 = vmatprep.subr.mxu0 0.0
        %383 = vmatpush1.msra.mxu0 0.0
        %384 = vmatprep.subr.mxu0 0.0
        %385 = vmatpush1.msra.mxu0 0.0
        %386 = vmatprep.subr.mxu0 0.0
        %387 = vmatpush1.msra.mxu0 0.0
        %388 = vmatprep.subr.mxu0 0.0
        %389 = vmatpush1.msra.mxu0 0.0
        %390 = vmatprep.subr.mxu0 0.0
        %391 = vmatpush1.msra.mxu0 0.0
        %392 = vmatprep.subr.mxu0 0.0
        %393 = vmatpush1.msra.mxu0 0.0
        %394 = vmatprep.subr.mxu0 0.0
        %395 = vmatpush1.msra.mxu0 0.0
        %396 = vmatprep.subr.mxu0 0.0
        %397 = vmatpush1.msra.mxu0 0.0
        %398 = vmatprep.subr.mxu0 0.0
        %399 = vmatpush1.msra.mxu0 0.0
        %400 = vmatprep.mubr.f32.mxu0 0.0
        %401 = vmatmul.mubr.f32.gmra.mrb[0].mxu0 %v334
        %v402 = vpop.f32.mrb[0].mxu0
        %v403 = vadd.f32 0.0, %v402
        %v404 = vpop.f32.mrb[0].mxu0
        %405 = vdwg.mxu0
        %v406 = vmax.f32 %v403, 0.0
        %v415 = vlaneseq
        %v416 = vshrl.u32 %v415, 7
        %v417 = vsub.s32 %v279, %v416
        %v418 = vrot.slane %v231, %v417
        %v419 = vlaneseq
        %v420 = vshrl.u32 %v419, 7
        %v421 = vsub.s32 %v284, %v420
        %v422 = vrot.slane %v234, %v421
        %v423 = vsel %vm289, %v422, %v418
        %v424 = vlaneseq
        %v425 = vshrl.u32 %v424, 7
        %v426 = vsub.s32 %v291, %v425
        %v427 = vrot.slane %v237, %v426
        %v428 = vsel %vm296, %v427, %v423
        %v429 = vlaneseq
        %v430 = vshrl.u32 %v429, 7
        %v431 = vsub.s32 %v298, %v430
        %v432 = vrot.slane %v240, %v431
        %v433 = vsel %vm303, %v432, %v428
        %v434 = vlaneseq
        %v435 = vshrl.u32 %v434, 7
        %v436 = vsub.s32 %v305, %v435
        %v437 = vrot.slane %v243, %v436
        %v438 = vsel %vm310, %v437, %v433
        %v439 = vlaneseq
        %v440 = vshrl.u32 %v439, 7
        %v441 = vsub.s32 %v312, %v440
        %v442 = vrot.slane %v246, %v441
        %v443 = vsel %vm317, %v442, %v438
        %v444 = vlaneseq
        %v445 = vshrl.u32 %v444, 7
        %v446 = vsub.s32 %v319, %v445
        %v447 = vrot.slane %v249, %v446
        %v448 = vsel %vm324, %v447, %v443
        %v449 = vlaneseq
        %v450 = vshrl.u32 %v449, 7
        %v451 = vsub.s32 %v326, %v450
        %v452 = vrot.slane %v252, %v451
        %v453 = vsel %vm331, %v452, %v448
        %v454 = vsel %vm333, %v453, 0
        %456 = vmatprep.subr.mxu0 0.0
        %457 = vmatpush1.msra.mxu0 %v261
        %458 = vmatprep.subr.mxu0 0.0
        %459 = vmatpush1.msra.mxu0 %v262
        %460 = vmatprep.subr.mxu0 0.0
        %461 = vmatpush1.msra.mxu0 %v263
        %462 = vmatprep.subr.mxu0 0.0
        %463 = vmatpush1.msra.mxu0 %v264
        %464 = vmatprep.subr.mxu0 0.0
        %465 = vmatpush1.msra.mxu0 %v265
        %466 = vmatprep.subr.mxu0 0.0
        %467 = vmatpush1.msra.mxu0 %v266
        %468 = vmatprep.subr.mxu0 0.0
        %469 = vmatpush1.msra.mxu0 %v267
        %470 = vmatprep.subr.mxu0 0.0
        %471 = vmatpush1.msra.mxu0 %v268
        %472 = vmatprep.subr.mxu0 0.0
        %473 = vmatpush1.msra.mxu0 0.0
        %474 = vmatprep.subr.mxu0 0.0
        %475 = vmatpush1.msra.mxu0 0.0
        %476 = vmatprep.subr.mxu0 0.0
        %477 = vmatpush1.msra.mxu0 0.0
        %478 = vmatprep.subr.mxu0 0.0
        %479 = vmatpush1.msra.mxu0 0.0
        %480 = vmatprep.subr.mxu0 0.0
        %481 = vmatpush1.msra.mxu0 0.0
        %482 = vmatprep.subr.mxu0 0.0
        %483 = vmatpush1.msra.mxu0 0.0
        %484 = vmatprep.subr.mxu0 0.0
        %485 = vmatpush1.msra.mxu0 0.0
        %486 = vmatprep.subr.mxu0 0.0
        %487 = vmatpush1.msra.mxu0 0.0
        %488 = vmatprep.subr.mxu0 0.0
        %489 = vmatpush1.msra.mxu0 0.0
        %490 = vmatprep.subr.mxu0 0.0
        %491 = vmatpush1.msra.mxu0 0.0
        %492 = vmatprep.subr.mxu0 0.0
        %493 = vmatpush1.msra.mxu0 0.0
        %494 = vmatprep.subr.mxu0 0.0
        %495 = vmatpush1.msra.mxu0 0.0
        %496 = vmatprep.subr.mxu0 0.0
        %497 = vmatpush1.msra.mxu0 0.0
        %498 = vmatprep.subr.mxu0 0.0
        %499 = vmatpush1.msra.mxu0 0.0
        %500 = vmatprep.subr.mxu0 0.0
        %501 = vmatpush1.msra.mxu0 0.0
        %502 = vmatprep.subr.mxu0 0.0
        %503 = vmatpush1.msra.mxu0 0.0
        %504 = vmatprep.subr.mxu0 0.0
        %505 = vmatpush1.msra.mxu0 0.0
        %506 = vmatprep.subr.mxu0 0.0
        %507 = vmatpush1.msra.mxu0 0.0
        %508 = vmatprep.subr.mxu0 0.0
        %509 = vmatpush1.msra.mxu0 0.0
        %510 = vmatprep.subr.mxu0 0.0
        %511 = vmatpush1.msra.mxu0 0.0
        %512 = vmatprep.subr.mxu0 0.0
        %513 = vmatpush1.msra.mxu0 0.0
        %514 = vmatprep.subr.mxu0 0.0
        %515 = vmatpush1.msra.mxu0 0.0
        %516 = vmatprep.subr.mxu0 0.0
        %517 = vmatpush1.msra.mxu0 0.0
        %518 = vmatprep.subr.mxu0 0.0
        %519 = vmatpush1.msra.mxu0 0.0
        %520 = vmatprep.mubr.f32.mxu0 0.0
        %521 = vmatmul.mubr.f32.gmra.mrb[0].mxu0 %v454
        %v522 = vpop.f32.mrb[0].mxu0
        %v523 = vadd.f32 0.0, %v522
        %v524 = vpop.f32.mrb[0].mxu0
        %525 = vdwg.mxu0
        %v526 = vmax.f32 %v523, 0.0
        %vm527 = vcmask 31744
        %v529 = vsel %vm527, %v526, 0
        %vm531 = vcmask 1043456
        %v533 = vsel %vm531, %v269, 0
        %535 = vmatprep.subr.mxu0 0.0
        %536 = vmatpush1.msra.mxu0 %v533
        %537 = vmatprep.subr.mxu0 0.0
        %538 = vmatpush1.msra.mxu0 0.0
        %539 = vmatprep.subr.mxu0 0.0
        %540 = vmatpush1.msra.mxu0 0.0
        %541 = vmatprep.subr.mxu0 0.0
        %542 = vmatpush1.msra.mxu0 0.0
        %543 = vmatprep.subr.mxu0 0.0
        %544 = vmatpush1.msra.mxu0 0.0
        %545 = vmatprep.subr.mxu0 0.0
        %546 = vmatpush1.msra.mxu0 0.0
        %547 = vmatprep.subr.mxu0 0.0
        %548 = vmatpush1.msra.mxu0 0.0
        %549 = vmatprep.subr.mxu0 0.0
        %550 = vmatpush1.msra.mxu0 0.0
        %551 = vmatprep.subr.mxu0 0.0
        %552 = vmatpush1.msra.mxu0 0.0
        %553 = vmatprep.subr.mxu0 0.0
        %554 = vmatpush1.msra.mxu0 0.0
        %555 = vmatprep.subr.mxu0 0.0
        %556 = vmatpush1.msra.mxu0 0.0
        %557 = vmatprep.subr.mxu0 0.0
        %558 = vmatpush1.msra.mxu0 0.0
        %559 = vmatprep.subr.mxu0 0.0
        %560 = vmatpush1.msra.mxu0 0.0
        %561 = vmatprep.subr.mxu0 0.0
        %562 = vmatpush1.msra.mxu0 0.0
        %563 = vmatprep.subr.mxu0 0.0
        %564 = vmatpush1.msra.mxu0 0.0
        %565 = vmatprep.subr.mxu0 0.0
        %566 = vmatpush1.msra.mxu0 0.0
        %567 = vmatprep.subr.mxu0 0.0
        %568 = vmatpush1.msra.mxu0 0.0
        %569 = vmatprep.subr.mxu0 0.0
        %570 = vmatpush1.msra.mxu0 0.0
        %571 = vmatprep.subr.mxu0 0.0
        %572 = vmatpush1.msra.mxu0 0.0
        %573 = vmatprep.subr.mxu0 0.0
        %574 = vmatpush1.msra.mxu0 0.0
        %575 = vmatprep.subr.mxu0 0.0
        %576 = vmatpush1.msra.mxu0 0.0
        %577 = vmatprep.subr.mxu0 0.0
        %578 = vmatpush1.msra.mxu0 0.0
        %579 = vmatprep.subr.mxu0 0.0
        %580 = vmatpush1.msra.mxu0 0.0
        %581 = vmatprep.subr.mxu0 0.0
        %582 = vmatpush1.msra.mxu0 0.0
        %583 = vmatprep.subr.mxu0 0.0
        %584 = vmatpush1.msra.mxu0 0.0
        %585 = vmatprep.subr.mxu0 0.0
        %586 = vmatpush1.msra.mxu0 0.0
        %587 = vmatprep.subr.mxu0 0.0
        %588 = vmatpush1.msra.mxu0 0.0
        %589 = vmatprep.subr.mxu0 0.0
        %590 = vmatpush1.msra.mxu0 0.0
        %591 = vmatprep.subr.mxu0 0.0
        %592 = vmatpush1.msra.mxu0 0.0
        %593 = vmatprep.subr.mxu0 0.0
        %594 = vmatpush1.msra.mxu0 0.0
        %595 = vmatprep.subr.mxu0 0.0
        %596 = vmatpush1.msra.mxu0 0.0
        %597 = vmatprep.subr.mxu0 0.0
        %598 = vmatpush1.msra.mxu0 0.0
        %599 = vmatprep.mubr.f32.mxu0 0.0
        %600 = vmatmul.mubr.f32.gmra.mrb[0].mxu0 %v529
        %v601 = vpop.f32.mrb[0].mxu0
        %v602 = vadd.f32 0.0, %v601
        %v603 = vpop.f32.mrb[0].mxu0
        %604 = vdwg.mxu0
        %v606 = vsel %vm527, %v406, 0
        %608 = vmatprep.subr.mxu0 0.0
        %609 = vmatpush1.msra.mxu0 %v533
        %610 = vmatprep.subr.mxu0 0.0
        %611 = vmatpush1.msra.mxu0 0.0
        %612 = vmatprep.subr.mxu0 0.0
        %613 = vmatpush1.msra.mxu0 0.0
        %614 = vmatprep.subr.mxu0 0.0
        %615 = vmatpush1.msra.mxu0 0.0
        %616 = vmatprep.subr.mxu0 0.0
        %617 = vmatpush1.msra.mxu0 0.0
        %618 = vmatprep.subr.mxu0 0.0
        %619 = vmatpush1.msra.mxu0 0.0
        %620 = vmatprep.subr.mxu0 0.0
        %621 = vmatpush1.msra.mxu0 0.0
        %622 = vmatprep.subr.mxu0 0.0
        %623 = vmatpush1.msra.mxu0 0.0
        %624 = vmatprep.subr.mxu0 0.0
        %625 = vmatpush1.msra.mxu0 0.0
        %626 = vmatprep.subr.mxu0 0.0
        %627 = vmatpush1.msra.mxu0 0.0
        %628 = vmatprep.subr.mxu0 0.0
        %629 = vmatpush1.msra.mxu0 0.0
        %630 = vmatprep.subr.mxu0 0.0
        %631 = vmatpush1.msra.mxu0 0.0
        %632 = vmatprep.subr.mxu0 0.0
        %633 = vmatpush1.msra.mxu0 0.0
        %634 = vmatprep.subr.mxu0 0.0
        %635 = vmatpush1.msra.mxu0 0.0
        %636 = vmatprep.subr.mxu0 0.0
        %637 = vmatpush1.msra.mxu0 0.0
        %638 = vmatprep.subr.mxu0 0.0
        %639 = vmatpush1.msra.mxu0 0.0
        %640 = vmatprep.subr.mxu0 0.0
        %641 = vmatpush1.msra.mxu0 0.0
        %642 = vmatprep.subr.mxu0 0.0
        %643 = vmatpush1.msra.mxu0 0.0
        %644 = vmatprep.subr.mxu0 0.0
        %645 = vmatpush1.msra.mxu0 0.0
        %646 = vmatprep.subr.mxu0 0.0
        %647 = vmatpush1.msra.mxu0 0.0
        %648 = vmatprep.subr.mxu0 0.0
        %649 = vmatpush1.msra.mxu0 0.0
        %650 = vmatprep.subr.mxu0 0.0
        %651 = vmatpush1.msra.mxu0 0.0
        %652 = vmatprep.subr.mxu0 0.0
        %653 = vmatpush1.msra.mxu0 0.0
        %654 = vmatprep.subr.mxu0 0.0
        %655 = vmatpush1.msra.mxu0 0.0
        %656 = vmatprep.subr.mxu0 0.0
        %657 = vmatpush1.msra.mxu0 0.0
        %658 = vmatprep.subr.mxu0 0.0
        %659 = vmatpush1.msra.mxu0 0.0
        %660 = vmatprep.subr.mxu0 0.0
        %661 = vmatpush1.msra.mxu0 0.0
        %662 = vmatprep.subr.mxu0 0.0
        %663 = vmatpush1.msra.mxu0 0.0
        %664 = vmatprep.subr.mxu0 0.0
        %665 = vmatpush1.msra.mxu0 0.0
        %666 = vmatprep.subr.mxu0 0.0
        %667 = vmatpush1.msra.mxu0 0.0
        %668 = vmatprep.subr.mxu0 0.0
        %669 = vmatpush1.msra.mxu0 0.0
        %670 = vmatprep.subr.mxu0 0.0
        %671 = vmatpush1.msra.mxu0 0.0
        %672 = vmatprep.mubr.f32.mxu0 0.0
        %673 = vmatmul.mubr.f32.gmra.mrb[0].mxu0 %v606
        %v674 = vpop.f32.mrb[0].mxu0
        %v675 = vadd.f32 %v602, %v674
        %v676 = vpop.f32.mrb[0].mxu0
        %677 = vdwg.mxu0
        %v678 = vxor.u32 %v675, 2147483648
        %v679 = vmul.f32 %v678, 1.442695
        %v680 = vpow.pop %v679
        %v681 = vadd.f32 %v680, 1.0
        %v682 = vrcp.pop %v681
        %v683 = vmul.f32 1.0, %v682
        %v684 = vlaneseq
        %v685 = vshrl.u32 %v684, 7
        %v686 = vsub.s32 0, %v685
        %v687 = vrot.slane %v683, %v686
        %689 = vbcast.lane.b32.xlu0 %v687, 256
        %v690 = vpop.permute.xlu0 %689
        %s692 = sor.u32 256, 8
        %693 = vbcast.lane.b32.xlu0 %v687, %s692
        %v694 = vpop.permute.xlu0 %693
        %s696 = sor.u32 256, 16
        %697 = vbcast.lane.b32.xlu0 %v687, %s696
        %v698 = vpop.permute.xlu0 %697
        %s700 = sor.u32 256, 24
        %701 = vbcast.lane.b32.xlu0 %v687, %s700
        %v702 = vpop.permute.xlu0 %701
        %s704 = sor.u32 256, 32
        %705 = vbcast.lane.b32.xlu0 %v687, %s704
        %v706 = vpop.permute.xlu0 %705
        %s708 = sor.u32 256, 40
        %709 = vbcast.lane.b32.xlu0 %v687, %s708
        %v710 = vpop.permute.xlu0 %709
        %s712 = sor.u32 256, 48
        %713 = vbcast.lane.b32.xlu0 %v687, %s712
        %v714 = vpop.permute.xlu0 %713
        %s716 = sor.u32 256, 56
        %717 = vbcast.lane.b32.xlu0 %v687, %s716
        %v718 = vpop.permute.xlu0 %717
        %v719 = vmul.f32 %v189, %v690
        %v720 = vmul.f32 %v190, %v690
        %v721 = vmul.f32 %v191, %v694
        %v722 = vmul.f32 %v192, %v694
        %v723 = vmul.f32 %v193, %v698
        %v724 = vmul.f32 %v194, %v698
        %v725 = vmul.f32 %v195, %v702
        %v726 = vmul.f32 %v196, %v702
        %v727 = vmul.f32 %v197, %v706
        %v728 = vmul.f32 %v198, %v706
        %v729 = vmul.f32 %v199, %v710
        %v730 = vmul.f32 %v200, %v710
        %v731 = vmul.f32 %v201, %v714
        %v732 = vmul.f32 %v202, %v714
        %v733 = vmul.f32 %v203, %v718
        %v734 = vmul.f32 %v204, %v718
        %735 = vst [vmem:[%s188] sm:$0xff] %v719
        %736 = vst [vmem:[%s188 + $0x8] sm:$0xff] %v720
        %737 = vst [vmem:[%s188 + $0x10] sm:$0xff] %v721
        %738 = vst [vmem:[%s188 + $0x18] sm:$0xff] %v722
        %739 = vst [vmem:[%s188 + $0x20] sm:$0xff] %v723
        %740 = vst [vmem:[%s188 + $0x28] sm:$0xff] %v724
        %741 = vst [vmem:[%s188 + $0x30] sm:$0xff] %v725
        %742 = vst [vmem:[%s188 + $0x38] sm:$0xff] %v726
        %743 = vst [vmem:[%s188 + $0x40] sm:$0xff] %v727
        %744 = vst [vmem:[%s188 + $0x48] sm:$0xff] %v728
        %745 = vst [vmem:[%s188 + $0x50] sm:$0xff] %v729
        %746 = vst [vmem:[%s188 + $0x58] sm:$0xff] %v730
        %747 = vst [vmem:[%s188 + $0x60] sm:$0xff] %v731
        %748 = vst [vmem:[%s188 + $0x68] sm:$0xff] %v732
        %749 = vst [vmem:[%s188 + $0x70] sm:$0xff] %v733
        %750 = vst [vmem:[%s188 + $0x78] sm:$0xff] %v734
        %s751 = sand.u32 %s96, 1
        %s752 = scalar_lea.sflag [#allocation4], %s751
        %s753 = sand.u32 %s96, 1
        %s754 = smul.addr %s753, 128
        %s755 = scalar_lea.vmem [#allocation5], %s754
        // Predicated region
        $region37: #{tpu_custom_call.1} parent=31 // pred_check
          %p756 = pneg %p106
        $region38: #{tpu_custom_call.1} parent=31 // pred_check_branch
          %758 = sbr.rel (%p756) target = $region40
        $region39: #{tpu_custom_call.1} parent=31 // pred_region
          %s760 = ssub.s32 2048, 2048
          %761 = vsyncadd %s752, %s760
          %s762 = smul.addr %s20, 16
          %s763 = smul.addr %s762, 128
          %s764 = scalar_lea.hbm %s3, %s763
          %s765 = sshll.u32 %s755, 4
          %s766 = int_to_ptr.vmem [resolvable:$true] %s765
          %771 = dma.vmem_to_hbm [thread:$0]  %s766, 2048, %s764, %s752, 256, 256, 16
        $region40: #{tpu_custom_call.1} parent=31 // pred_fallthru
          _
      $region32: #{tpu_custom_call.1} parent=5 // pred_fallthru
        _
      %p772 = scmp.le.s32.totalorder 2, %s15
      // Predicated region
      $region41: #{tpu_custom_call.1} parent=5 // pred_check
        %p773 = pneg %p772
      $region42: #{tpu_custom_call.1} parent=5 // pred_check_branch
        %775 = sbr.rel (%p773) target = $region44
      $region43: #{tpu_custom_call.1} parent=5 // pred_region
        %s776 = ssub.s32 %s15, 2
        // Predicated region
        $region45: #{tpu_custom_call.1} parent=43 // pred_check
          %p777 = pneg %p112
        $region46: #{tpu_custom_call.1} parent=43 // pred_check_branch
          %779 = sbr.rel (%p777) target = $region48
        $region47: #{tpu_custom_call.1} parent=43 // pred_region
          %s780 = sand.u32 %s97, 1
          %s781 = scalar_lea.sflag [#allocation4], %s780
          %s782 = sand.u32 %s97, 1
          %s783 = smul.addr %s782, 128
          %s784 = scalar_lea.vmem [#allocation5], %s783
          %785 = dma.done %s781, 2048
        $region48: #{tpu_custom_call.1} parent=43 // pred_fallthru
          _
      $region44: #{tpu_custom_call.1} parent=5 // pred_fallthru
        _
    $region6: #{tpu_custom_call.1} parent=1 // loop_footer
      %s19 = sadd.s32 1, %s15
    $region7: #{tpu_custom_call.1} parent=1 // loop_footer_branch
      %14 = sbr.rel target = $region3
    $region8: #{tpu_custom_call.1} parent=1 // loop_exit
      _
    %786 = vsyncpa [#allocation3], 1
    %s787 = scalar_lea.sflag [#allocation3], 1
    %788 = vsyncpa %s787, 1
    %789 = vsyncpa [#allocation4], 1
    %s790 = scalar_lea.sflag [#allocation4], 1
    %791 = vsyncpa %s790, 1

</llo_original>
